<compile_context>
chip_gen: v7x
topology: tpu7x:2x2x1
jax: 0.10.0
libtpu: 0.0.40
codegen_flags: <defaults>
</compile_context>

<pallas_src>
import functools
import math

import numpy as np
import jax
import jax.numpy as jnp
from jax.experimental import pallas as pl
from jax.experimental.pallas import tpu as pltpu

NEG_SLOPE = 0.2       # GATv2Conv default negative_slope
MASK_VAL = -1e30      # additive mask for non-edges (representable in bf16 too)
LANE = 128


def _round_up(v, m):
    return ((v + m - 1) // m) * m


def _pad2(a, shape):
    return jnp.zeros(shape, a.dtype).at[:a.shape[0], :a.shape[1]].set(a)


# ---------------------------------------------------------------------------
# Kernel 1: fused node projections  g = x @ [Wl | Wr] + [bl | br]
# One K-pass over x fills the wide MXU; split into gl / gr in the wrapper.
# O(N*F) -> single invocation, whole arrays in VMEM (row-tile if N gets huge).
# ---------------------------------------------------------------------------
def _proj_kernel(x_ref, w_ref, b_ref, g_ref):
    g_ref[...] = jnp.dot(x_ref[...], w_ref[...],
                         preferred_element_type=jnp.float32) + b_ref[...]


# ---------------------------------------------------------------------------
# Kernel 2: GATv2 attention + aggregation + bias + residual + ReLU
# grid = (target-row tiles, source-col tiles); online softmax over source axis.
# ---------------------------------------------------------------------------
def _gatv2_flash_kernel(adj_ref, ewm_ref, gr_ref, glT_ref, bias_ref,
                        we_ref, att_ref, *rest,
                        heads, dims, first, compute_dtype):
    if first:
        o_ref, acc_ref, m_ref, l_ref = rest
        res_ref = None
    else:
        res_ref, o_ref, acc_ref, m_ref, l_ref = rest

    j = pl.program_id(1)
    tm, hc_pad = acc_ref.shape
    hc = heads * dims
    pad = hc_pad - hc
    cdt = compute_dtype

    @pl.when(j == 0)
    def _init():
        acc_ref[...] = jnp.zeros_like(acc_ref)
        m_ref[...] = jnp.full_like(m_ref, MASK_VAL)
        l_ref[...] = jnp.zeros_like(l_ref)

    # Per-tile streams, shared by all heads/channels.
    ew = ewm_ref[...].astype(cdt)                                 # [TM, TN]
    neg = jnp.where(adj_ref[...] > 0,
                    jnp.float32(0.0), jnp.float32(MASK_VAL)).astype(cdt)

    dots, scales = [], []
    for h in range(heads):                                        # static unroll
        c0 = h * dims
        logits = neg
        for c in range(dims):                                     # per-channel, all 2-D lane-dense
            col = c0 + c
            t = (gr_ref[:, col:col + 1].astype(cdt)               # [TM, 1] target channel
                 + glT_ref[col, :][None, :].astype(cdt)           # [1, TN] source channel
                 + ew * we_ref[h, c].astype(cdt))                 # edge proj (SMEM scalar)
            t = jnp.maximum(t, NEG_SLOPE * t)                     # leaky_relu (0 < slope < 1)
            logits = logits + att_ref[h, c].astype(cdt) * t       # FMA

        logits = logits.astype(jnp.float32)
        # Online softmax update for head h (masked entries underflow to 0).
        m_prev = m_ref[h]                                         # [TM, 1]
        m_new = jnp.maximum(m_prev, jnp.max(logits, axis=-1, keepdims=True))
        p = jnp.exp(logits - m_new)                               # [TM, TN] f32
        scale = jnp.exp(m_prev - m_new)                           # [TM, 1]
        l_ref[h] = scale * l_ref[h] + jnp.sum(p, axis=-1, keepdims=True)
        m_ref[h] = m_new
        # Aggregate against glT rows (MXU, "p @ gl" via transposed contraction;
        # no separate gl stream needed).
        dots.append(jax.lax.dot_general(
            p, glT_ref[c0:c0 + dims, :],
            dimension_numbers=(((1,), (1,)), ((), ())),
            preferred_element_type=jnp.float32))                  # [TM, dims]
        scales.append(jnp.broadcast_to(scale, (tm, dims)))

    # Single full-width (lane-dense) accumulator RMW per grid step.
    if pad > 0:
        dots.append(jnp.zeros((tm, pad), jnp.float32))
        scales.append(jnp.ones((tm, pad), jnp.float32))
    dot_slab = jnp.concatenate(dots, axis=-1)                     # [TM, hc_pad]
    scale_slab = jnp.concatenate(scales, axis=-1)                 # [TM, hc_pad]
    acc_ref[...] = scale_slab * acc_ref[...] + dot_slab

    @pl.when(j == pl.num_programs(1) - 1)
    def _finalize():
        # Fold 1/l into the small accumulator with one full-width multiply
        # (EUP approximate reciprocal).
        invs = [jnp.broadcast_to(pl.reciprocal(l_ref[h], approx=True), (tm, dims))
                for h in range(heads)]
        if pad > 0:
            invs.append(jnp.ones((tm, pad), jnp.float32))
        out = acc_ref[...] * jnp.concatenate(invs, axis=-1) + bias_ref[...]
        if not first:
            out = out + res_ref[...]                              # residual
        # Dropout(0.25) is identity in eval mode.
        # TODO(synk): training-mode dropout (RNG mask) not implemented.
        o_ref[...] = jnp.maximum(out, 0.0)                        # one wide lane-dense store


# ---------------------------------------------------------------------------
# Plain-JAX glue: self loops (fill_value='mean') + dense adjacency / weights.
# adj is int8 (mask only); ewm stays f32 to keep logits exact.
# ---------------------------------------------------------------------------
def build_dense_graph(edge_index, edge_weights, num_nodes):
    src = edge_index[0]
    dst = edge_index[1]
    ew = edge_weights.reshape(-1).astype(jnp.float32)

    seg_sum = jax.ops.segment_sum(ew, dst, num_segments=num_nodes)
    seg_cnt = jax.ops.segment_sum(jnp.ones_like(ew), dst, num_segments=num_nodes)
    loop_attr = jnp.where(seg_cnt > 0, seg_sum / jnp.maximum(seg_cnt, 1.0), 0.0)

    loops = jnp.arange(num_nodes, dtype=src.dtype)
    src_f = jnp.concatenate([src, loops])
    dst_f = jnp.concatenate([dst, loops])
    ew_f = jnp.concatenate([ew, loop_attr])

    adj = jnp.zeros((num_nodes, num_nodes), jnp.int8).at[dst_f, src_f].set(1)
    ewm = jnp.zeros((num_nodes, num_nodes), jnp.float32).at[dst_f, src_f].set(ew_f)
    return adj, ewm


def res_layer_forward(x, edge_index, edge_weights, params, *, heads, out_dim, first,
                      tile_m=256, tile_n=512, compute_dtype=jnp.float32):
    # compute_dtype=jnp.bfloat16 is recommended on v6e/v7x (bf16 VALU/EUP);
    # keep float32 on v5e.  m/l/rescale/acc/exp stay f32 either way.
    n, f_in = x.shape
    hc = heads * out_dim
    if not first and f_in != hc:
        raise ValueError("non-first ResLayer expects input dim == heads*out_dim")

    # --- tile selection ----------------------------------------------------
    # tile_n lane-aligned (128), tile_m multiple of 32 (int8 adj sublane tile).
    # Clamp tile_n so small graphs don't over-pad columns; clamp tile_m so the
    # row grid keeps >= 2 tiles (v7x megacore shards the "parallel" axis).
    tile_n = max(LANE, min(tile_n, _round_up(n, LANE)))
    tile_m = max(32, min(tile_m, _round_up((n + 1) // 2, 32)))
    assert tile_n % LANE == 0 and tile_m % 32 == 0

    f_pad = _round_up(f_in, LANE)
    hc_pad = _round_up(hc, LANE)
    n_rows = _round_up(n, tile_m)          # target (row) padding
    n_cols = _round_up(n, tile_n)          # source (col) padding, decoupled
    n_big = max(n_rows, n_cols)

    adj, ewm = build_dense_graph(edge_index, edge_weights, n)
    adj_p = _pad2(adj, (n_rows, n_cols))
    ewm_p = _pad2(ewm, (n_rows, n_cols))
    x_p = _pad2(x.astype(jnp.float32), (n_big, f_pad))

    # Fused [Wl | Wr] projection weights / biases (padded, lane-aligned halves).
    w_cat = jnp.zeros((f_pad, 2 * hc_pad), jnp.float32)
    w_cat = w_cat.at[:f_in, :hc].set(params["wl"])
    w_cat = w_cat.at[:f_in, hc_pad:hc_pad + hc].set(params["wr"])
    b_cat = jnp.zeros((1, 2 * hc_pad), jnp.float32)
    b_cat = b_cat.at[:, :hc].set(params["bl"])
    b_cat = b_cat.at[:, hc_pad:hc_pad + hc].set(params["br"])
    bias_p = _pad2(params["bias"], (1, hc_pad))

    # --- projections (hoisted out of the tiled attention grid) -------------
    vmem = pl.BlockSpec(memory_space=pltpu.MemorySpace.VMEM)
    g = pl.pallas_call(
        _proj_kernel,
        out_shape=jax.ShapeDtypeStruct((n_big, 2 * hc_pad), jnp.float32),
        in_specs=[vmem] * 3,
        out_specs=vmem,
    )(x_p, w_cat, b_cat)

    gr_p = g[:n_rows, hc_pad:]             # [n_rows, hc_pad] target-side proj
    glT_p = g[:n_cols, :hc_pad].T          # [hc_pad, n_cols] source nodes on lanes

    grid = (n_rows // tile_m, n_cols // tile_n)
    kernel = functools.partial(_gatv2_flash_kernel, heads=heads, dims=out_dim,
                               first=first, compute_dtype=compute_dtype)
    smem = pl.BlockSpec(memory_space=pltpu.MemorySpace.SMEM)

    in_specs = [
        pl.BlockSpec((tile_m, tile_n), lambda i, j: (i, j)),    # adjacency mask (int8)
        pl.BlockSpec((tile_m, tile_n), lambda i, j: (i, j)),    # edge-weight tile (f32)
        pl.BlockSpec((tile_m, hc_pad), lambda i, j: (i, 0)),    # gr (target rows)
        pl.BlockSpec((hc_pad, tile_n), lambda i, j: (0, j)),    # gl^T (source cols)
        pl.BlockSpec((1, hc_pad), lambda i, j: (0, 0)),         # GATv2 bias
        smem,                                                   # lin_edge weight [H,C]
        smem,                                                   # attention vector [H,C]
    ]
    inputs = [adj_p, ewm_p, gr_p, glT_p, bias_p, params["we"], params["att"]]
    if not first:
        # Residual stream only exists when there is a residual to add.
        in_specs.append(pl.BlockSpec((tile_m, hc_pad), lambda i, j: (i, 0)))
        inputs.append(x_p[:n_rows, :hc_pad])

    n2 = n_rows * n_cols
    cost = pl.CostEstimate(
        flops=int(n2 * heads * (6 * out_dim + 8) + 2 * n2 * hc),
        transcendentals=int(n2 * heads),
        bytes_accessed=int(n2 * (1 + 4) + 4 * 3 * (n_rows + n_cols) * hc_pad),
    )

    out_p = pl.pallas_call(
        kernel,
        out_shape=jax.ShapeDtypeStruct((n_rows, hc_pad), jnp.float32),
        grid_spec=pltpu.PrefetchScalarGridSpec(
            num_scalar_prefetch=0,
            grid=grid,
            in_specs=in_specs,
            out_specs=pl.BlockSpec((tile_m, hc_pad), lambda i, j: (i, 0)),
            scratch_shapes=[
                pltpu.VMEM((tile_m, hc_pad), jnp.float32),      # output accumulator
                pltpu.VMEM((heads, tile_m, 1), jnp.float32),    # running max per head
                pltpu.VMEM((heads, tile_m, 1), jnp.float32),    # running sum per head
            ]),
        compiler_params=pltpu.CompilerParams(
            dimension_semantics=("parallel", "arbitrary"),
            vmem_limit_bytes=32 * 1024 * 1024),
        cost_estimate=cost,
    )(*inputs)

    return out_p[:n, :hc]


# ---------------------------------------------------------------------------
# Pure-JAX reference (same dense formulation) for validation.
# ---------------------------------------------------------------------------
def ref_forward(x, edge_index, edge_weights, params, *, heads, out_dim, first):
    n = x.shape[0]
    adj, ewm = build_dense_graph(edge_index, edge_weights, n)
    adj = adj.astype(jnp.float32)
    gl = x @ params["wl"] + params["bl"]
    gr = x @ params["wr"] + params["br"]
    outs = []
    for h in range(heads):
        c0 = h * out_dim
        gl_h = gl[:, c0:c0 + out_dim]
        gr_h = gr[:, c0:c0 + out_dim]
        we_h = params["we"][h]
        att_h = params["att"][h]
        s = gr_h[:, None, :] + gl_h[None, :, :] + ewm[:, :, None] * we_h[None, None, :]
        s = jnp.where(s >= 0.0, s, NEG_SLOPE * s)
        logits = jnp.sum(s * att_h[None, None, :], axis=-1)
        logits = jnp.where(adj > 0.0, logits, MASK_VAL)
        m = jnp.max(logits, axis=-1, keepdims=True)
        p = jnp.exp(logits - m) * adj
        alpha = p / jnp.sum(p, axis=-1, keepdims=True)
        outs.append(alpha @ gl_h)
    out = jnp.concatenate(outs, axis=-1) + params["bias"]
    if not first:
        out = out + x
    return jnp.maximum(out, 0.0)


def glorot(key, shape):
    fan_in, fan_out = shape[0], shape[-1]
    limit = math.sqrt(6.0 / (fan_in + fan_out))
    return jax.random.uniform(key, shape, minval=-limit, maxval=limit, dtype=jnp.float32)


if __name__ == "__main__":
    dims, heads, n_nodes = 8, 6, 200          # 200 nodes -> 2 row tiles x 1 col tile
    first = False
    f_in = dims * heads                       # non-first ResLayer: input dim = dims*heads
    hc = heads * dims

    key = jax.random.PRNGKey(0)
    k_x, k_wl, k_wr, k_we, k_att, k_ew = jax.random.split(key, 6)

    params = {
        "wl": glorot(k_wl, (f_in, hc)),
        "bl": jnp.zeros((1, hc), jnp.float32),
        "wr": glorot(k_wr, (f_in, hc)),
        "br": jnp.zeros((1, hc), jnp.float32),
        "we": glorot(k_we, (heads, dims)),    # lin_edge(1 -> heads*dims), no bias
        "att": glorot(k_att, (heads, dims)),  # attention vector per head
        "bias": jnp.zeros((1, hc), jnp.float32),
    }

    # deterministic simple graph: 3 "ring" offsets, no self loops, no duplicates
    base = np.arange(n_nodes)
    src_np = np.concatenate([base, base, base])
    dst_np = np.concatenate([(base + 1) % n_nodes, (base + 3) % n_nodes,
                             (base + 7) % n_nodes])
    edge_index = jnp.asarray(np.stack([src_np, dst_np]), dtype=jnp.int32)
    edge_weights = jax.random.uniform(k_ew, (edge_index.shape[1],), dtype=jnp.float32)

    x = jax.random.normal(k_x, (n_nodes, f_in), dtype=jnp.float32)

    out = res_layer_forward(x, edge_index, edge_weights, params,
                            heads=heads, out_dim=dims, first=first)
    out = jax.block_until_ready(out)

    ref = ref_forward(x, edge_index, edge_weights, params,
                      heads=heads, out_dim=dims, first=first)
    # tolerance accounts for the approximate EUP reciprocal in the softmax norm
    np.testing.assert_allclose(np.asarray(out), np.asarray(ref), rtol=5e-3, atol=5e-3)

    print("KERNEL_OK")
</pallas_src>

<mosaic_0001>
module attributes {stable_mosaic.version = 11 : i64} {
  func.func @_proj_kernel(%arg0: memref<256x128xf32, #tpu.memory_space<vmem>>, %arg1: memref<128x256xf32, #tpu.memory_space<vmem>>, %arg2: memref<1x256xf32, #tpu.memory_space<vmem>>, %arg3: memref<256x256xf32, #tpu.memory_space<vmem>>) attributes {dimension_semantics = [], scalar_prefetch = 0 : i64, scratch_operands = 0 : i64, tpu.core_type = #tpu.core_type<tc>} {
    %c0 = arith.constant 0 : index
    %c0_0 = arith.constant 0 : index
    %0 = vector.load %arg0[%c0, %c0_0] : memref<256x128xf32, #tpu.memory_space<vmem>>, vector<256x128xf32>
    %c0_1 = arith.constant 0 : index
    %c0_2 = arith.constant 0 : index
    %1 = vector.load %arg1[%c0_1, %c0_2] : memref<128x256xf32, #tpu.memory_space<vmem>>, vector<128x256xf32>
    %cst = arith.constant dense<0.000000e+00> : vector<256x256xf32>
    %2 = tpu.matmul %0, %1, %cst {dimension_numbers = #tpu.dot_dimension_numbers<[1], [0], [0], [1], [0, 0, 1, 1], [], []>} : vector<256x128xf32>, vector<128x256xf32>, vector<256x256xf32> -> vector<256x256xf32>
    %c0_3 = arith.constant 0 : index
    %c0_4 = arith.constant 0 : index
    %3 = vector.load %arg2[%c0_3, %c0_4] : memref<1x256xf32, #tpu.memory_space<vmem>>, vector<1x256xf32>
    %4 = vector.broadcast %3 : vector<1x256xf32> to vector<256x256xf32>
    %5 = arith.addf %2, %4 : vector<256x256xf32>
    %c0_5 = arith.constant 0 : index
    %c0_6 = arith.constant 0 : index
    %6 = vector.load %arg3[%c0_5, %c0_6] : memref<256x256xf32, #tpu.memory_space<vmem>>, vector<256x256xf32>
    tpu.vector_store %arg3[%c0_5, %c0_6], %5 {strides = array<i32>} : memref<256x256xf32, #tpu.memory_space<vmem>>, vector<256x256xf32>,
    return
  }
}

</mosaic_0001>

<llo_original>
// kernel: tpu_custom_call.1
$region0: #{tpu_custom_call.1}
  #allocation0 [shape = 'u32[]', space=smem, size = 0x4, offset = 0x4, fixed_abs, tag = 'smem constant byte address 0x4 - core index']
  #allocation1 [shape = 'u32[144,128]{1,0:T(1,128)}', space=vmem, size = 0x12000, scoped, tag = 'internal scratch']
  %s0 = inlined_call_operand.hbm [shape: f32[256,128], index: 0, kind: input, shape index: {}]
  %s1 = inlined_call_operand.hbm [shape: f32[128,256], index: 1, kind: input, shape index: {}]
  %s2 = inlined_call_operand.vmem [shape: f32[1,256], index: 2, kind: input, shape index: {}]
  %s3 = inlined_call_operand.hbm [shape: f32[256,256], index: 3, kind: output, shape index: {}]
  %s4 = sld [smem:[#allocation0]]
  $region30: #{tpu_custom_call.1} parent=0
    _
  %s6 = ssub.s32 1, %s4
  %s7 = scalar_select 0, %s6, %s4
  $region1: #{tpu_custom_call.1} parent=0
    #allocation2 [shape = 'u8[131072]{0}', space=vmem, size = 0x20000, scoped, tag = 'input window, operand 0, single buffered']
    #allocation3 [shape = 's32[1]{0}', space=sflag, size = 0x4, scoped, tag = 'scoped memory for tpu_custom_call.1']
    #allocation4 [shape = 's32[1]{0}', space=sflag, size = 0x4, scoped, tag = 'scoped memory for tpu_custom_call.1']
    #allocation5 [shape = 'u8[131072]{0}', space=vmem, size = 0x20000, scoped, tag = 'input window, operand 1, single buffered']
    #allocation6 [shape = 's32[1]{0}', space=sflag, size = 0x4, scoped, tag = 'scoped memory for tpu_custom_call.1']
    #allocation7 [shape = 'u8[262144]{0}', space=vmem, size = 0x40000, scoped, tag = 'output window, operand 0, single buffered']
    %8 = vsyncpa [#allocation3], 0
    %9 = vsyncpa [#allocation6], 0
    %10 = vsyncpa [#allocation4], 0
    // Predicated region
    $region2: #{tpu_custom_call.1} parent=1 // pred_check
      _
    $region3: #{tpu_custom_call.1} parent=1 // pred_check_branch
      %12 = sbr.rel (0) target = $region5
    $region4: #{tpu_custom_call.1} parent=1 // pred_region
      %s14 = ssub.s32 4096, 4096
      %15 = vsyncadd [#allocation3], %s14
      %s16 = sshll.u32 [#allocation2], 4
      %s17 = int_to_ptr.vmem [resolvable:$true] %s16
      %22 = dma.hbm_to_vmem [thread:$0]  %s0, 4096, %s17, [#allocation3], 128, 128, 8
    $region5: #{tpu_custom_call.1} parent=1 // pred_fallthru
      _
    // Predicated region
    $region6: #{tpu_custom_call.1} parent=1 // pred_check
      _
    $region7: #{tpu_custom_call.1} parent=1 // pred_check_branch
      %24 = sbr.rel (0) target = $region9
    $region8: #{tpu_custom_call.1} parent=1 // pred_region
      %s26 = ssub.s32 4096, 4096
      %27 = vsyncadd [#allocation6], %s26
      %s28 = sshll.u32 [#allocation5], 4
      %s29 = int_to_ptr.vmem [resolvable:$true] %s28
      %34 = dma.hbm_to_vmem [thread:$0]  %s1, 4096, %s29, [#allocation6], 256, 256, 16
    $region9: #{tpu_custom_call.1} parent=1 // pred_fallthru
      _
    // Predicated region
    $region10: #{tpu_custom_call.1} parent=1 // pred_check
      _
    $region11: #{tpu_custom_call.1} parent=1 // pred_check_branch
      %36 = sbr.rel (0) target = $region13
    $region12: #{tpu_custom_call.1} parent=1 // pred_region
      _
    $region13: #{tpu_custom_call.1} parent=1 // pred_fallthru
      _
    // Predicated region
    $region14: #{tpu_custom_call.1} parent=1 // pred_check
      _
    $region15: #{tpu_custom_call.1} parent=1 // pred_check_branch
      %38 = sbr.rel (0) target = $region17
    $region16: #{tpu_custom_call.1} parent=1 // pred_region
      %39 = dma.done [#allocation3], 4096
    $region17: #{tpu_custom_call.1} parent=1 // pred_fallthru
      _
    // Predicated region
    $region18: #{tpu_custom_call.1} parent=1 // pred_check
      _
    $region19: #{tpu_custom_call.1} parent=1 // pred_check_branch
      %41 = sbr.rel (0) target = $region21
    $region20: #{tpu_custom_call.1} parent=1 // pred_region
      %42 = dma.done [#allocation6], 4096
    $region21: #{tpu_custom_call.1} parent=1 // pred_fallthru
      _
    %v43 = vld [vmem:[#allocation2] sm:$0xff]
    %v44 = vld [vmem:[#allocation2 + $0x8] sm:$0xff]
    %v45 = vld [vmem:[#allocation2 + $0x10] sm:$0xff]
    %v46 = vld [vmem:[#allocation2 + $0x18] sm:$0xff]
    %v47 = vld [vmem:[#allocation2 + $0x20] sm:$0xff]
    %v48 = vld [vmem:[#allocation2 + $0x28] sm:$0xff]
    %v49 = vld [vmem:[#allocation2 + $0x30] sm:$0xff]
    %v50 = vld [vmem:[#allocation2 + $0x38] sm:$0xff]
    %v51 = vld [vmem:[#allocation2 + $0x40] sm:$0xff]
    %v52 = vld [vmem:[#allocation2 + $0x48] sm:$0xff]
    %v53 = vld [vmem:[#allocation2 + $0x50] sm:$0xff]
    %v54 = vld [vmem:[#allocation2 + $0x58] sm:$0xff]
    %v55 = vld [vmem:[#allocation2 + $0x60] sm:$0xff]
    %v56 = vld [vmem:[#allocation2 + $0x68] sm:$0xff]
    %v57 = vld [vmem:[#allocation2 + $0x70] sm:$0xff]
    %v58 = vld [vmem:[#allocation2 + $0x78] sm:$0xff]
    %v59 = vld [vmem:[#allocation2 + $0x80] sm:$0xff]
    %v60 = vld [vmem:[#allocation2 + $0x88] sm:$0xff]
    %v61 = vld [vmem:[#allocation2 + $0x90] sm:$0xff]
    %v62 = vld [vmem:[#allocation2 + $0x98] sm:$0xff]
    %v63 = vld [vmem:[#allocation2 + $0xa0] sm:$0xff]
    %v64 = vld [vmem:[#allocation2 + $0xa8] sm:$0xff]
    %v65 = vld [vmem:[#allocation2 + $0xb0] sm:$0xff]
    %v66 = vld [vmem:[#allocation2 + $0xb8] sm:$0xff]
    %v67 = vld [vmem:[#allocation2 + $0xc0] sm:$0xff]
    %v68 = vld [vmem:[#allocation2 + $0xc8] sm:$0xff]
    %v69 = vld [vmem:[#allocation2 + $0xd0] sm:$0xff]
    %v70 = vld [vmem:[#allocation2 + $0xd8] sm:$0xff]
    %v71 = vld [vmem:[#allocation2 + $0xe0] sm:$0xff]
    %v72 = vld [vmem:[#allocation2 + $0xe8] sm:$0xff]
    %v73 = vld [vmem:[#allocation2 + $0xf0] sm:$0xff]
    %v74 = vld [vmem:[#allocation2 + $0xf8] sm:$0xff]
    %v75 = vld [vmem:[#allocation5] sm:$0xff]
    %v76 = vld [vmem:[#allocation5 + $0x8] sm:$0xff]
    %v77 = vld [vmem:[#allocation5 + $0x10] sm:$0xff]
    %v78 = vld [vmem:[#allocation5 + $0x18] sm:$0xff]
    %v79 = vld [vmem:[#allocation5 + $0x20] sm:$0xff]
    %v80 = vld [vmem:[#allocation5 + $0x28] sm:$0xff]
    %v81 = vld [vmem:[#allocation5 + $0x30] sm:$0xff]
    %v82 = vld [vmem:[#allocation5 + $0x38] sm:$0xff]
    %v83 = vld [vmem:[#allocation5 + $0x40] sm:$0xff]
    %v84 = vld [vmem:[#allocation5 + $0x48] sm:$0xff]
    %v85 = vld [vmem:[#allocation5 + $0x50] sm:$0xff]
    %v86 = vld [vmem:[#allocation5 + $0x58] sm:$0xff]
    %v87 = vld [vmem:[#allocation5 + $0x60] sm:$0xff]
    %v88 = vld [vmem:[#allocation5 + $0x68] sm:$0xff]
    %v89 = vld [vmem:[#allocation5 + $0x70] sm:$0xff]
    %v90 = vld [vmem:[#allocation5 + $0x78] sm:$0xff]
    %v91 = vld [vmem:[#allocation5 + $0x80] sm:$0xff]
    %v92 = vld [vmem:[#allocation5 + $0x88] sm:$0xff]
    %v93 = vld [vmem:[#allocation5 + $0x90] sm:$0xff]
    %v94 = vld [vmem:[#allocation5 + $0x98] sm:$0xff]
    %v95 = vld [vmem:[#allocation5 + $0xa0] sm:$0xff]
    %v96 = vld [vmem:[#allocation5 + $0xa8] sm:$0xff]
    %v97 = vld [vmem:[#allocation5 + $0xb0] sm:$0xff]
    %v98 = vld [vmem:[#allocation5 + $0xb8] sm:$0xff]
    %v99 = vld [vmem:[#allocation5 + $0xc0] sm:$0xff]
    %v100 = vld [vmem:[#allocation5 + $0xc8] sm:$0xff]
    %v101 = vld [vmem:[#allocation5 + $0xd0] sm:$0xff]
    %v102 = vld [vmem:[#allocation5 + $0xd8] sm:$0xff]
    %v103 = vld [vmem:[#allocation5 + $0xe0] sm:$0xff]
    %v104 = vld [vmem:[#allocation5 + $0xe8] sm:$0xff]
    %v105 = vld [vmem:[#allocation5 + $0xf0] sm:$0xff]
    %v106 = vld [vmem:[#allocation5 + $0xf8] sm:$0xff]
    %v107 = vld [vmem:[%s2] sm:$0x3]
    %v109 = vlaneseq
    %v110 = vshrl.u32 %v109, 7
    %v111 = vsub.s32 0, %v110
    %v112 = vrot.slane %v107, %v111
    %v113 = vlaneseq
    %v114 = vshrl.u32 %v113, 7
    %v115 = vsub.s32 1, %v114
    %v116 = vrot.slane %v107, %v115
    %119 = vmatprep.subr.mxu0 %v76
    %120 = vmatpush1.msra.mxu0 %v75
    %121 = vmatprep.subr.mxu0 %v78
    %122 = vmatpush1.msra.mxu0 %v77
    %123 = vmatprep.subr.mxu0 %v80
    %124 = vmatpush1.msra.mxu0 %v79
    %125 = vmatprep.subr.mxu0 %v82
    %126 = vmatpush1.msra.mxu0 %v81
    %127 = vmatprep.subr.mxu0 %v84
    %128 = vmatpush1.msra.mxu0 %v83
    %129 = vmatprep.subr.mxu0 %v86
    %130 = vmatpush1.msra.mxu0 %v85
    %131 = vmatprep.subr.mxu0 %v88
    %132 = vmatpush1.msra.mxu0 %v87
    %133 = vmatprep.subr.mxu0 %v90
    %134 = vmatpush1.msra.mxu0 %v89
    %135 = vmatprep.subr.mxu0 %v92
    %136 = vmatpush1.msra.mxu0 %v91
    %137 = vmatprep.subr.mxu0 %v94
    %138 = vmatpush1.msra.mxu0 %v93
    %139 = vmatprep.subr.mxu0 %v96
    %140 = vmatpush1.msra.mxu0 %v95
    %141 = vmatprep.subr.mxu0 %v98
    %142 = vmatpush1.msra.mxu0 %v97
    %143 = vmatprep.subr.mxu0 %v100
    %144 = vmatpush1.msra.mxu0 %v99
    %145 = vmatprep.subr.mxu0 %v102
    %146 = vmatpush1.msra.mxu0 %v101
    %147 = vmatprep.subr.mxu0 %v104
    %148 = vmatpush1.msra.mxu0 %v103
    %149 = vmatprep.subr.mxu0 %v106
    %150 = vmatpush1.msra.mxu0 %v105
    %151 = vmatprep.subr.mxu0 0.0
    %152 = vmatpush1.msra.mxu0 0.0
    %153 = vmatprep.subr.mxu0 0.0
    %154 = vmatpush1.msra.mxu0 0.0
    %155 = vmatprep.subr.mxu0 0.0
    %156 = vmatpush1.msra.mxu0 0.0
    %157 = vmatprep.subr.mxu0 0.0
    %158 = vmatpush1.msra.mxu0 0.0
    %159 = vmatprep.subr.mxu0 0.0
    %160 = vmatpush1.msra.mxu0 0.0
    %161 = vmatprep.subr.mxu0 0.0
    %162 = vmatpush1.msra.mxu0 0.0
    %163 = vmatprep.subr.mxu0 0.0
    %164 = vmatpush1.msra.mxu0 0.0
    %165 = vmatprep.subr.mxu0 0.0
    %166 = vmatpush1.msra.mxu0 0.0
    %167 = vmatprep.subr.mxu0 0.0
    %168 = vmatpush1.msra.mxu0 0.0
    %169 = vmatprep.subr.mxu0 0.0
    %170 = vmatpush1.msra.mxu0 0.0
    %171 = vmatprep.subr.mxu0 0.0
    %172 = vmatpush1.msra.mxu0 0.0
    %173 = vmatprep.subr.mxu0 0.0
    %174 = vmatpush1.msra.mxu0 0.0
    %175 = vmatprep.subr.mxu0 0.0
    %176 = vmatpush1.msra.mxu0 0.0
    %177 = vmatprep.subr.mxu0 0.0
    %178 = vmatpush1.msra.mxu0 0.0
    %179 = vmatprep.subr.mxu0 0.0
    %180 = vmatpush1.msra.mxu0 0.0
    %181 = vmatprep.subr.mxu0 0.0
    %182 = vmatpush1.msra.mxu0 0.0
    %183 = vmatprep.mubr.f32.mxu0 0.0
    %184 = vmatmul.mubr.f32.gmra.mrb[0].mxu0 %v43
    %v185 = vpop.f32.mrb[0].mxu0
    %v186 = vadd.f32 %v112, %v185
    %v187 = vpop.f32.mrb[0].mxu0
    %v188 = vadd.f32 %v116, %v187
    %189 = vmatprep.mubr.f32.mxu0 0.0
    %190 = vmatmul.mubr.f32.gmra.mrb[0].mxu0 %v44
    %v191 = vpop.f32.mrb[0].mxu0
    %v192 = vadd.f32 %v112, %v191
    %v193 = vpop.f32.mrb[0].mxu0
    %v194 = vadd.f32 %v116, %v193
    %195 = vmatprep.mubr.f32.mxu0 0.0
    %196 = vmatmul.mubr.f32.gmra.mrb[0].mxu0 %v45
    %v197 = vpop.f32.mrb[0].mxu0
    %v198 = vadd.f32 %v112, %v197
    %v199 = vpop.f32.mrb[0].mxu0
    %v200 = vadd.f32 %v116, %v199
    %201 = vmatprep.mubr.f32.mxu0 0.0
    %202 = vmatmul.mubr.f32.gmra.mrb[0].mxu0 %v46
    %v203 = vpop.f32.mrb[0].mxu0
    %v204 = vadd.f32 %v112, %v203
    %v205 = vpop.f32.mrb[0].mxu0
    %v206 = vadd.f32 %v116, %v205
    %207 = vmatprep.mubr.f32.mxu0 0.0
    %208 = vmatmul.mubr.f32.gmra.mrb[0].mxu0 %v47
    %v209 = vpop.f32.mrb[0].mxu0
    %v210 = vadd.f32 %v112, %v209
    %v211 = vpop.f32.mrb[0].mxu0
    %v212 = vadd.f32 %v116, %v211
    %213 = vmatprep.mubr.f32.mxu0 0.0
    %214 = vmatmul.mubr.f32.gmra.mrb[0].mxu0 %v48
    %v215 = vpop.f32.mrb[0].mxu0
    %v216 = vadd.f32 %v112, %v215
    %v217 = vpop.f32.mrb[0].mxu0
    %v218 = vadd.f32 %v116, %v217
    %219 = vmatprep.mubr.f32.mxu0 0.0
    %220 = vmatmul.mubr.f32.gmra.mrb[0].mxu0 %v49
    %v221 = vpop.f32.mrb[0].mxu0
    %v222 = vadd.f32 %v112, %v221
    %v223 = vpop.f32.mrb[0].mxu0
    %v224 = vadd.f32 %v116, %v223
    %225 = vmatprep.mubr.f32.mxu0 0.0
    %226 = vmatmul.mubr.f32.gmra.mrb[0].mxu0 %v50
    %v227 = vpop.f32.mrb[0].mxu0
    %v228 = vadd.f32 %v112, %v227
    %v229 = vpop.f32.mrb[0].mxu0
    %v230 = vadd.f32 %v116, %v229
    %231 = vmatprep.mubr.f32.mxu0 0.0
    %232 = vmatmul.mubr.f32.gmra.mrb[0].mxu0 %v51
    %v233 = vpop.f32.mrb[0].mxu0
    %v234 = vadd.f32 %v112, %v233
    %v235 = vpop.f32.mrb[0].mxu0
    %v236 = vadd.f32 %v116, %v235
    %237 = vmatprep.mubr.f32.mxu0 0.0
    %238 = vmatmul.mubr.f32.gmra.mrb[0].mxu0 %v52
    %v239 = vpop.f32.mrb[0].mxu0
    %v240 = vadd.f32 %v112, %v239
    %v241 = vpop.f32.mrb[0].mxu0
    %v242 = vadd.f32 %v116, %v241
    %243 = vmatprep.mubr.f32.mxu0 0.0
    %244 = vmatmul.mubr.f32.gmra.mrb[0].mxu0 %v53
    %v245 = vpop.f32.mrb[0].mxu0
    %v246 = vadd.f32 %v112, %v245
    %v247 = vpop.f32.mrb[0].mxu0
    %v248 = vadd.f32 %v116, %v247
    %249 = vmatprep.mubr.f32.mxu0 0.0
    %250 = vmatmul.mubr.f32.gmra.mrb[0].mxu0 %v54
    %v251 = vpop.f32.mrb[0].mxu0
    %v252 = vadd.f32 %v112, %v251
    %v253 = vpop.f32.mrb[0].mxu0
    %v254 = vadd.f32 %v116, %v253
    %255 = vmatprep.mubr.f32.mxu0 0.0
    %256 = vmatmul.mubr.f32.gmra.mrb[0].mxu0 %v55
    %v257 = vpop.f32.mrb[0].mxu0
    %v258 = vadd.f32 %v112, %v257
    %v259 = vpop.f32.mrb[0].mxu0
    %v260 = vadd.f32 %v116, %v259
    %261 = vmatprep.mubr.f32.mxu0 0.0
    %262 = vmatmul.mubr.f32.gmra.mrb[0].mxu0 %v56
    %v263 = vpop.f32.mrb[0].mxu0
    %v264 = vadd.f32 %v112, %v263
    %v265 = vpop.f32.mrb[0].mxu0
    %v266 = vadd.f32 %v116, %v265
    %267 = vmatprep.mubr.f32.mxu0 0.0
    %268 = vmatmul.mubr.f32.gmra.mrb[0].mxu0 %v57
    %v269 = vpop.f32.mrb[0].mxu0
    %v270 = vadd.f32 %v112, %v269
    %v271 = vpop.f32.mrb[0].mxu0
    %v272 = vadd.f32 %v116, %v271
    %273 = vmatprep.mubr.f32.mxu0 0.0
    %274 = vmatmul.mubr.f32.gmra.mrb[0].mxu0 %v58
    %v275 = vpop.f32.mrb[0].mxu0
    %v276 = vadd.f32 %v112, %v275
    %v277 = vpop.f32.mrb[0].mxu0
    %v278 = vadd.f32 %v116, %v277
    %279 = vmatprep.mubr.f32.mxu0 0.0
    %280 = vmatmul.mubr.f32.gmra.mrb[0].mxu0 %v59
    %v281 = vpop.f32.mrb[0].mxu0
    %v282 = vadd.f32 %v112, %v281
    %v283 = vpop.f32.mrb[0].mxu0
    %v284 = vadd.f32 %v116, %v283
    %285 = vmatprep.mubr.f32.mxu0 0.0
    %286 = vmatmul.mubr.f32.gmra.mrb[0].mxu0 %v60
    %v287 = vpop.f32.mrb[0].mxu0
    %v288 = vadd.f32 %v112, %v287
    %v289 = vpop.f32.mrb[0].mxu0
    %v290 = vadd.f32 %v116, %v289
    %291 = vmatprep.mubr.f32.mxu0 0.0
    %292 = vmatmul.mubr.f32.gmra.mrb[0].mxu0 %v61
    %v293 = vpop.f32.mrb[0].mxu0
    %v294 = vadd.f32 %v112, %v293
    %v295 = vpop.f32.mrb[0].mxu0
    %v296 = vadd.f32 %v116, %v295
    %297 = vmatprep.mubr.f32.mxu0 0.0
    %298 = vmatmul.mubr.f32.gmra.mrb[0].mxu0 %v62
    %v299 = vpop.f32.mrb[0].mxu0
    %v300 = vadd.f32 %v112, %v299
    %v301 = vpop.f32.mrb[0].mxu0
    %v302 = vadd.f32 %v116, %v301
    %303 = vmatprep.mubr.f32.mxu0 0.0
    %304 = vmatmul.mubr.f32.gmra.mrb[0].mxu0 %v63
    %v305 = vpop.f32.mrb[0].mxu0
    %v306 = vadd.f32 %v112, %v305
    %v307 = vpop.f32.mrb[0].mxu0
    %v308 = vadd.f32 %v116, %v307
    %309 = vmatprep.mubr.f32.mxu0 0.0
    %310 = vmatmul.mubr.f32.gmra.mrb[0].mxu0 %v64
    %v311 = vpop.f32.mrb[0].mxu0
    %v312 = vadd.f32 %v112, %v311
    %v313 = vpop.f32.mrb[0].mxu0
    %v314 = vadd.f32 %v116, %v313
    %315 = vmatprep.mubr.f32.mxu0 0.0
    %316 = vmatmul.mubr.f32.gmra.mrb[0].mxu0 %v65
    %v317 = vpop.f32.mrb[0].mxu0
    %v318 = vadd.f32 %v112, %v317
    %v319 = vpop.f32.mrb[0].mxu0
    %v320 = vadd.f32 %v116, %v319
    %321 = vmatprep.mubr.f32.mxu0 0.0
    %322 = vmatmul.mubr.f32.gmra.mrb[0].mxu0 %v66
    %v323 = vpop.f32.mrb[0].mxu0
    %v324 = vadd.f32 %v112, %v323
    %v325 = vpop.f32.mrb[0].mxu0
    %v326 = vadd.f32 %v116, %v325
    %327 = vmatprep.mubr.f32.mxu0 0.0
    %328 = vmatmul.mubr.f32.gmra.mrb[0].mxu0 %v67
    %v329 = vpop.f32.mrb[0].mxu0
    %v330 = vadd.f32 %v112, %v329
    %v331 = vpop.f32.mrb[0].mxu0
    %v332 = vadd.f32 %v116, %v331
    %333 = vmatprep.mubr.f32.mxu0 0.0
    %334 = vmatmul.mubr.f32.gmra.mrb[0].mxu0 %v68
    %v335 = vpop.f32.mrb[0].mxu0
    %v336 = vadd.f32 %v112, %v335
    %v337 = vpop.f32.mrb[0].mxu0
    %v338 = vadd.f32 %v116, %v337
    %339 = vmatprep.mubr.f32.mxu0 0.0
    %340 = vmatmul.mubr.f32.gmra.mrb[0].mxu0 %v69
    %v341 = vpop.f32.mrb[0].mxu0
    %v342 = vadd.f32 %v112, %v341
    %v343 = vpop.f32.mrb[0].mxu0
    %v344 = vadd.f32 %v116, %v343
    %345 = vmatprep.mubr.f32.mxu0 0.0
    %346 = vmatmul.mubr.f32.gmra.mrb[0].mxu0 %v70
    %v347 = vpop.f32.mrb[0].mxu0
    %v348 = vadd.f32 %v112, %v347
    %v349 = vpop.f32.mrb[0].mxu0
    %v350 = vadd.f32 %v116, %v349
    %351 = vmatprep.mubr.f32.mxu0 0.0
    %352 = vmatmul.mubr.f32.gmra.mrb[0].mxu0 %v71
    %v353 = vpop.f32.mrb[0].mxu0
    %v354 = vadd.f32 %v112, %v353
    %v355 = vpop.f32.mrb[0].mxu0
    %v356 = vadd.f32 %v116, %v355
    %357 = vmatprep.mubr.f32.mxu0 0.0
    %358 = vmatmul.mubr.f32.gmra.mrb[0].mxu0 %v72
    %v359 = vpop.f32.mrb[0].mxu0
    %v360 = vadd.f32 %v112, %v359
    %v361 = vpop.f32.mrb[0].mxu0
    %v362 = vadd.f32 %v116, %v361
    %363 = vmatprep.mubr.f32.mxu0 0.0
    %364 = vmatmul.mubr.f32.gmra.mrb[0].mxu0 %v73
    %v365 = vpop.f32.mrb[0].mxu0
    %v366 = vadd.f32 %v112, %v365
    %v367 = vpop.f32.mrb[0].mxu0
    %v368 = vadd.f32 %v116, %v367
    %369 = vmatprep.mubr.f32.mxu0 0.0
    %370 = vmatmul.mubr.f32.gmra.mrb[0].mxu0 %v74
    %v371 = vpop.f32.mrb[0].mxu0
    %v372 = vadd.f32 %v112, %v371
    %v373 = vpop.f32.mrb[0].mxu0
    %v374 = vadd.f32 %v116, %v373
    %375 = vdwg.mxu0
    %376 = vst [vmem:[#allocation7] sm:$0xff] %v186
    %377 = vst [vmem:[#allocation7 + $0x8] sm:$0xff] %v188
    %378 = vst [vmem:[#allocation7 + $0x10] sm:$0xff] %v192
    %379 = vst [vmem:[#allocation7 + $0x18] sm:$0xff] %v194
    %380 = vst [vmem:[#allocation7 + $0x20] sm:$0xff] %v198
    %381 = vst [vmem:[#allocation7 + $0x28] sm:$0xff] %v200
    %382 = vst [vmem:[#allocation7 + $0x30] sm:$0xff] %v204
    %383 = vst [vmem:[#allocation7 + $0x38] sm:$0xff] %v206
    %384 = vst [vmem:[#allocation7 + $0x40] sm:$0xff] %v210
    %385 = vst [vmem:[#allocation7 + $0x48] sm:$0xff] %v212
    %386 = vst [vmem:[#allocation7 + $0x50] sm:$0xff] %v216
    %387 = vst [vmem:[#allocation7 + $0x58] sm:$0xff] %v218
    %388 = vst [vmem:[#allocation7 + $0x60] sm:$0xff] %v222
    %389 = vst [vmem:[#allocation7 + $0x68] sm:$0xff] %v224
    %390 = vst [vmem:[#allocation7 + $0x70] sm:$0xff] %v228
    %391 = vst [vmem:[#allocation7 + $0x78] sm:$0xff] %v230
    %392 = vst [vmem:[#allocation7 + $0x80] sm:$0xff] %v234
    %393 = vst [vmem:[#allocation7 + $0x88] sm:$0xff] %v236
    %394 = vst [vmem:[#allocation7 + $0x90] sm:$0xff] %v240
    %395 = vst [vmem:[#allocation7 + $0x98] sm:$0xff] %v242
    %396 = vst [vmem:[#allocation7 + $0xa0] sm:$0xff] %v246
    %397 = vst [vmem:[#allocation7 + $0xa8] sm:$0xff] %v248
    %398 = vst [vmem:[#allocation7 + $0xb0] sm:$0xff] %v252
    %399 = vst [vmem:[#allocation7 + $0xb8] sm:$0xff] %v254
    %400 = vst [vmem:[#allocation7 + $0xc0] sm:$0xff] %v258
    %401 = vst [vmem:[#allocation7 + $0xc8] sm:$0xff] %v260
    %402 = vst [vmem:[#allocation7 + $0xd0] sm:$0xff] %v264
    %403 = vst [vmem:[#allocation7 + $0xd8] sm:$0xff] %v266
    %404 = vst [vmem:[#allocation7 + $0xe0] sm:$0xff] %v270
    %405 = vst [vmem:[#allocation7 + $0xe8] sm:$0xff] %v272
    %406 = vst [vmem:[#allocation7 + $0xf0] sm:$0xff] %v276
    %407 = vst [vmem:[#allocation7 + $0xf8] sm:$0xff] %v278
    %408 = vst [vmem:[#allocation7 + $0x100] sm:$0xff] %v282
    %409 = vst [vmem:[#allocation7 + $0x108] sm:$0xff] %v284
    %410 = vst [vmem:[#allocation7 + $0x110] sm:$0xff] %v288
    %411 = vst [vmem:[#allocation7 + $0x118] sm:$0xff] %v290
    %412 = vst [vmem:[#allocation7 + $0x120] sm:$0xff] %v294
    %413 = vst [vmem:[#allocation7 + $0x128] sm:$0xff] %v296
    %414 = vst [vmem:[#allocation7 + $0x130] sm:$0xff] %v300
    %415 = vst [vmem:[#allocation7 + $0x138] sm:$0xff] %v302
    %416 = vst [vmem:[#allocation7 + $0x140] sm:$0xff] %v306
    %417 = vst [vmem:[#allocation7 + $0x148] sm:$0xff] %v308
    %418 = vst [vmem:[#allocation7 + $0x150] sm:$0xff] %v312
    %419 = vst [vmem:[#allocation7 + $0x158] sm:$0xff] %v314
    %420 = vst [vmem:[#allocation7 + $0x160] sm:$0xff] %v318
    %421 = vst [vmem:[#allocation7 + $0x168] sm:$0xff] %v320
    %422 = vst [vmem:[#allocation7 + $0x170] sm:$0xff] %v324
    %423 = vst [vmem:[#allocation7 + $0x178] sm:$0xff] %v326
    %424 = vst [vmem:[#allocation7 + $0x180] sm:$0xff] %v330
    %425 = vst [vmem:[#allocation7 + $0x188] sm:$0xff] %v332
    %426 = vst [vmem:[#allocation7 + $0x190] sm:$0xff] %v336
    %427 = vst [vmem:[#allocation7 + $0x198] sm:$0xff] %v338
    %428 = vst [vmem:[#allocation7 + $0x1a0] sm:$0xff] %v342
    %429 = vst [vmem:[#allocation7 + $0x1a8] sm:$0xff] %v344
    %430 = vst [vmem:[#allocation7 + $0x1b0] sm:$0xff] %v348
    %431 = vst [vmem:[#allocation7 + $0x1b8] sm:$0xff] %v350
    %432 = vst [vmem:[#allocation7 + $0x1c0] sm:$0xff] %v354
    %433 = vst [vmem:[#allocation7 + $0x1c8] sm:$0xff] %v356
    %434 = vst [vmem:[#allocation7 + $0x1d0] sm:$0xff] %v360
    %435 = vst [vmem:[#allocation7 + $0x1d8] sm:$0xff] %v362
    %436 = vst [vmem:[#allocation7 + $0x1e0] sm:$0xff] %v366
    %437 = vst [vmem:[#allocation7 + $0x1e8] sm:$0xff] %v368
    %438 = vst [vmem:[#allocation7 + $0x1f0] sm:$0xff] %v372
    %439 = vst [vmem:[#allocation7 + $0x1f8] sm:$0xff] %v374
    // Predicated region
    $region22: #{tpu_custom_call.1} parent=1 // pred_check
      _
    $region23: #{tpu_custom_call.1} parent=1 // pred_check_branch
      %441 = sbr.rel (0) target = $region25
    $region24: #{tpu_custom_call.1} parent=1 // pred_region
      %s443 = ssub.s32 8192, 8192
      %444 = vsyncadd [#allocation4], %s443
      %s445 = sshll.u32 [#allocation7], 4
      %s446 = int_to_ptr.vmem [resolvable:$true] %s445
      %451 = dma.vmem_to_hbm [thread:$0]  %s446, 8192, %s3, [#allocation4], 256, 256, 16
    $region25: #{tpu_custom_call.1} parent=1 // pred_fallthru
      _
    // Predicated region
    $region26: #{tpu_custom_call.1} parent=1 // pred_check
      _
    $region27: #{tpu_custom_call.1} parent=1 // pred_check_branch
      %453 = sbr.rel (0) target = $region29
    $region28: #{tpu_custom_call.1} parent=1 // pred_region
      %454 = dma.done [#allocation4], 8192
    $region29: #{tpu_custom_call.1} parent=1 // pred_fallthru
      _
    %455 = vsyncpa [#allocation3], 1
    %456 = vsyncpa [#allocation6], 1
    %457 = vsyncpa [#allocation4], 1

</llo_original>
